<compile_context>
chip_gen: v5e
topology: v5e:2x2
jax: 0.10.0
libtpu: 0.0.40
codegen_flags: <defaults>
</compile_context>

<pallas_src>
import math

import jax
import jax.numpy as jnp
from jax.experimental import pallas as pl
from jax.experimental.pallas import tpu as pltpu


def _round_up(x, m):
    return (x + m - 1) // m * m


# Below this contraction size the MXU is <2% occupied -> use VPU mul-adds.
_MXU_MIN_K = 16
# Below this many output elements the pallas_call / DMA fixed overhead (µs)
# dwarfs the math -> plain XLA fused affine.
_MIN_PALLAS_ELEMS = 1 << 16


def _fused_affine_kernel(x_ref, w_ref, b_ref, o_ref):
    """One (tile_b, tile_n) output tile of  o = x @ W_fused + b_fused."""
    in_dim = x_ref.shape[-1]
    if in_dim < _MXU_MIN_K:
        # Tiny K (K=2 for FC_Encoder): skip the MXU, do K VPU broadcast
        # multiply-adds with f32 accumulation. Statically unrolled.
        x = x_ref[...]
        w = w_ref[...]
        acc = jnp.broadcast_to(b_ref[...].astype(jnp.float32), o_ref.shape)
        for k in range(in_dim):
            acc = acc + (x[:, k:k + 1].astype(jnp.float32)
                         * w[k:k + 1, :].astype(jnp.float32))
    else:
        acc = jnp.dot(x_ref[...], w_ref[...],
                      preferred_element_type=jnp.float32)
        acc = acc + b_ref[...].astype(jnp.float32)
    o_ref[...] = acc.astype(o_ref.dtype)


def _fuse_affine_chain(weights, biases):
    """Collapse the Linear chain into one affine map (f32).

    NOTE: this algebraic fusion is only valid because FC_Encoder applies NO
    activation between layers. If an activation is ever inserted, replace
    this with a per-layer pipeline.
    """
    w_f = weights[0].astype(jnp.float32)
    b_f = biases[0].astype(jnp.float32)
    for w, b in zip(weights[1:], biases[1:]):
        w = w.astype(jnp.float32)
        b = b.astype(jnp.float32)
        w_f = w_f @ w
        b_f = b_f @ w + b
    return w_f, b_f


def fc_encoder_forward(x, weights, biases, *, compute_dtype=None,
                       force_pallas=False):
    """Forward pass of FC_Encoder.

    x: (batch, 2). weights[i]: (in_i, out_i) (transpose of PyTorch weight).
    biases[i]: (1, out_i). compute_dtype: optional kernel dtype for x and the
    fused params (e.g. jnp.bfloat16); accumulation is f32 and the output
    keeps x.dtype.
    """
    if len(weights) == 0:            # FC_Encoder([]) is the identity
        return x
    assert len(weights) == len(biases)

    w_f, b_f = _fuse_affine_chain(weights, biases)
    batch = x.shape[0]
    in_dim, out_dim = w_f.shape
    assert x.shape[1] == in_dim
    out_dtype = x.dtype

    # Tiny problems: plain fused affine in XLA beats kernel launch overhead.
    if not force_pallas and batch * out_dim < _MIN_PALLAS_ELEMS:
        return (x.astype(jnp.float32) @ w_f + b_f).astype(out_dtype)

    if compute_dtype is not None:
        x_k = x.astype(compute_dtype)
        w_k = w_f.astype(compute_dtype)
        b_k = b_f.astype(compute_dtype)
    else:
        x_k, w_k, b_k = x, w_f, b_f

    # ---- Balanced batch tiling; >=2 grid steps when batch allows, so both
    # v7x TensorCores get work under "parallel" semantics. ---------------------
    n_bt = pl.cdiv(batch, 512)
    if batch >= 16:
        n_bt = max(n_bt, 2)
    tile_b = _round_up(pl.cdiv(batch, n_bt), 8)
    grid_b = pl.cdiv(batch, tile_b)
    batch_p = grid_b * tile_b
    if batch_p != batch:
        x_k = jnp.pad(x_k, ((0, batch_p - batch), (0, 0)))

    # ---- Out-feature tiling only when wide; otherwise a single full-width
    # block (last dim == full array dim is legal — no zero padding to 128). ----
    if out_dim >= 512 and out_dim % 128 == 0:
        tile_n = 256 if out_dim % 256 == 0 else 128
    else:
        tile_n = out_dim
    grid_n = out_dim // tile_n
    grid = (grid_b, grid_n)

    def _isz(a):
        return jnp.dtype(a.dtype).itemsize

    out_isz = jnp.dtype(out_dtype).itemsize
    cost = pl.CostEstimate(
        flops=2 * batch_p * in_dim * out_dim,
        transcendentals=0,
        bytes_accessed=(batch_p * in_dim * _isz(x_k)
                        + w_k.size * _isz(w_k)
                        + b_k.size * _isz(b_k)
                        + batch_p * out_dim * out_isz),
    )
    # Explicit VMEM budget: double-buffered x/out tiles + params, + headroom.
    vmem_limit = int(1.5 * (2 * tile_b * in_dim * _isz(x_k)
                            + 2 * tile_b * tile_n * out_isz
                            + 2 * in_dim * tile_n * _isz(w_k)
                            + 2 * tile_n * _isz(b_k))) + (4 << 20)
    vmem_limit = min(max(vmem_limit, 8 << 20), 64 << 20)

    def _call(single_buffer_params):
        pm = dict(pipeline_mode=pl.Buffered(1)) if single_buffer_params else {}
        return pl.pallas_call(
            _fused_affine_kernel,
            out_shape=jax.ShapeDtypeStruct((batch_p, out_dim), out_dtype),
            grid_spec=pltpu.PrefetchScalarGridSpec(
                num_scalar_prefetch=0,
                grid=grid,
                in_specs=[
                    pl.BlockSpec((tile_b, in_dim), lambda i, j: (i, 0)),        # x
                    pl.BlockSpec((in_dim, tile_n), lambda i, j: (0, j), **pm),  # W_fused
                    pl.BlockSpec((1, tile_n), lambda i, j: (0, j), **pm),       # b_fused
                ],
                out_specs=pl.BlockSpec((tile_b, tile_n), lambda i, j: (i, j)),
            ),
            compiler_params=pltpu.CompilerParams(
                dimension_semantics=("parallel", "parallel"),
                vmem_limit_bytes=vmem_limit,
            ),
            cost_estimate=cost,
        )(x_k, w_k, b_k)

    if grid_n == 1:
        # Fused W / b are grid-invariant -> single-buffer them (halves their
        # VMEM residency; matters most on v7x's 64 MiB VMEM). Fall back to
        # default double-buffering if this jax build rejects Buffered(1).
        try:
            out_p = _call(True)
        except Exception:
            out_p = _call(False)
    else:
        out_p = _call(False)

    return out_p[:batch] if batch_p != batch else out_p


def init_fc_encoder_params(key, layer_dims):
    """Replicates FC_Encoder.__init__: dims = [2] + layer_dims, a chain of
    nn.Linear(dims[i], dims[i+1]) with PyTorch's default uniform init."""
    dims = [2] + list(layer_dims)
    weights, biases = [], []
    for i in range(len(dims) - 1):
        fan_in, fan_out = dims[i], dims[i + 1]
        key, kw, kb = jax.random.split(key, 3)
        bound = 1.0 / math.sqrt(fan_in)
        # Stored transposed vs PyTorch: (in, out) instead of (out, in).
        weights.append(jax.random.uniform(kw, (fan_in, fan_out), jnp.float32,
                                          -bound, bound))
        biases.append(jax.random.uniform(kb, (1, fan_out), jnp.float32,
                                         -bound, bound))
    return weights, biases


def fc_encoder_reference(x, weights, biases):
    h = x
    for w, b in zip(weights, biases):
        h = h @ w + b
    return h


if __name__ == "__main__":
    key = jax.random.PRNGKey(0)
    key, kx = jax.random.split(key)

    layer_dims = [32, 64, 16]      # hidden sizes of the FC encoder
    batch = 64
    x = jax.random.normal(kx, (batch, 2), dtype=jnp.float32)
    weights, biases = init_fc_encoder_params(key, layer_dims)

    ref = fc_encoder_reference(x, weights, biases)

    # 1) Pallas kernel path (forced: this shipped config is small enough that
    #    the auto-dispatch would otherwise pick the plain-XLA fallback).
    out = jax.block_until_ready(
        fc_encoder_forward(x, weights, biases, force_pallas=True))
    assert out.shape == (batch, layer_dims[-1])
    # Fusing W0@W1@... changes FP association order; diffs are ~1e-6 in f32.
    assert jnp.allclose(out, ref, atol=1e-4, rtol=1e-4)

    # 2) bf16 params/activations inside the kernel (v6e/v7x-friendly), f32
    #    accumulation, f32 output.
    out_bf16 = jax.block_until_ready(
        fc_encoder_forward(x, weights, biases, compute_dtype=jnp.bfloat16,
                           force_pallas=True))
    assert jnp.allclose(out_bf16, ref, atol=5e-2, rtol=5e-2)

    # 3) tiny-problem auto-dispatch (plain XLA fused affine, no pallas_call).
    out_small = jax.block_until_ready(fc_encoder_forward(x[:8], weights, biases))
    assert jnp.allclose(out_small, ref[:8], atol=1e-4, rtol=1e-4)

    print("KERNEL_OK")
</pallas_src>

<mosaic_0001>
module attributes {stable_mosaic.version = 11 : i64} {
  func.func @_fused_affine_kernel(%arg0: i32, %arg1: i32, %arg2: memref<32x2xf32, #tpu.memory_space<vmem>>, %arg3: memref<2x16xf32, #tpu.memory_space<vmem>>, %arg4: memref<1x16xf32, #tpu.memory_space<vmem>>, %arg5: memref<32x16xf32, #tpu.memory_space<vmem>>) attributes {dimension_semantics = [#tpu.dimension_semantics<parallel>, #tpu.dimension_semantics<parallel>], iteration_bounds = array<i64: 2, 1>, scalar_prefetch = 0 : i64, scratch_operands = 0 : i64, tpu.core_type = #tpu.core_type<tc>, window_params = [{transform_indices = @transform_0, window_bounds = array<i64: 32, 2>}, {pipeline_mode = #tpu.pipeline_mode<synchronous>, transform_indices = @transform_1, window_bounds = array<i64: 2, 16>}, {pipeline_mode = #tpu.pipeline_mode<synchronous>, transform_indices = @transform_2, window_bounds = array<i64: 1, 16>}, {transform_indices = @transform_3, window_bounds = array<i64: 32, 16>}]} {
    %c0 = arith.constant 0 : index
    %c0_0 = arith.constant 0 : index
    %0 = vector.load %arg2[%c0, %c0_0] : memref<32x2xf32, #tpu.memory_space<vmem>>, vector<32x2xf32>
    %c0_1 = arith.constant 0 : index
    %c0_2 = arith.constant 0 : index
    %1 = vector.load %arg3[%c0_1, %c0_2] : memref<2x16xf32, #tpu.memory_space<vmem>>, vector<2x16xf32>
    %c0_3 = arith.constant 0 : index
    %c0_4 = arith.constant 0 : index
    %2 = vector.load %arg4[%c0_3, %c0_4] : memref<1x16xf32, #tpu.memory_space<vmem>>, vector<1x16xf32>
    %3 = vector.shape_cast %2 : vector<1x16xf32> to vector<1x16xf32>
    %4 = vector.broadcast %3 : vector<1x16xf32> to vector<32x16xf32>
    %5 = vector.extract_strided_slice %0 {offsets = [0, 0], sizes = [32, 1], strides = [1, 1]} : vector<32x2xf32> to vector<32x1xf32>
    %6 = vector.extract_strided_slice %1 {offsets = [0, 0], sizes = [1, 16], strides = [1, 1]} : vector<2x16xf32> to vector<1x16xf32>
    %7 = vector.broadcast %5 : vector<32x1xf32> to vector<32x16xf32>
    %8 = vector.broadcast %6 : vector<1x16xf32> to vector<32x16xf32>
    %9 = arith.mulf %7, %8 : vector<32x16xf32>
    %10 = arith.addf %4, %9 : vector<32x16xf32>
    %11 = vector.extract_strided_slice %0 {offsets = [0, 1], sizes = [32, 1], strides = [1, 1]} : vector<32x2xf32> to vector<32x1xf32>
    %12 = vector.extract_strided_slice %1 {offsets = [1, 0], sizes = [1, 16], strides = [1, 1]} : vector<2x16xf32> to vector<1x16xf32>
    %13 = vector.broadcast %11 : vector<32x1xf32> to vector<32x16xf32>
    %14 = vector.broadcast %12 : vector<1x16xf32> to vector<32x16xf32>
    %15 = arith.mulf %13, %14 : vector<32x16xf32>
    %16 = arith.addf %10, %15 : vector<32x16xf32>
    %c0_5 = arith.constant 0 : index
    %c0_6 = arith.constant 0 : index
    %17 = vector.load %arg5[%c0_5, %c0_6] : memref<32x16xf32, #tpu.memory_space<vmem>>, vector<32x16xf32>
    tpu.vector_store %arg5[%c0_5, %c0_6], %16 {strides = array<i32>} : memref<32x16xf32, #tpu.memory_space<vmem>>, vector<32x16xf32>,
    return
  }
  func.func @transform_0(%arg0: i32, %arg1: i32) -> (i32, i32) {
    %c0_i32 = arith.constant 0 : i32
    %c0_i32_0 = arith.constant 0 : i32
    return %arg0, %c0_i32 : i32, i32
  }
  func.func @transform_1(%arg0: i32, %arg1: i32) -> (i32, i32) {
    %c0_i32 = arith.constant 0 : i32
    %c0_i32_0 = arith.constant 0 : i32
    return %c0_i32, %arg1 : i32, i32
  }
  func.func @transform_2(%arg0: i32, %arg1: i32) -> (i32, i32) {
    %c0_i32 = arith.constant 0 : i32
    %c0_i32_0 = arith.constant 0 : i32
    return %c0_i32, %arg1 : i32, i32
  }
  func.func @transform_3(%arg0: i32, %arg1: i32) -> (i32, i32) {
    %c0_i32 = arith.constant 0 : i32
    return %arg0, %arg1 : i32, i32
  }
}

module attributes {stable_mosaic.version = 11 : i64} {
  func.func @_fused_affine_kernel(%arg0: i32, %arg1: i32, %arg2: memref<32x2xf32, #tpu.memory_space<vmem>>, %arg3: memref<2x16xf32, #tpu.memory_space<vmem>>, %arg4: memref<1x16xf32, #tpu.memory_space<vmem>>, %arg5: memref<32x16xf32, #tpu.memory_space<vmem>>) attributes {dimension_semantics = [#tpu.dimension_semantics<parallel>, #tpu.dimension_semantics<parallel>], iteration_bounds = array<i64: 2, 1>, scalar_prefetch = 0 : i64, scratch_operands = 0 : i64, tpu.core_type = #tpu.core_type<tc>, window_params = [{transform_indices = @transform_0, window_bounds = array<i64: 32, 2>}, {transform_indices = @transform_1, window_bounds = array<i64: 2, 16>}, {transform_indices = @transform_2, window_bounds = array<i64: 1, 16>}, {transform_indices = @transform_3, window_bounds = array<i64: 32, 16>}]} {
    %c0 = arith.constant 0 : index
    %c0_0 = arith.constant 0 : index
    %0 = vector.load %arg2[%c0, %c0_0] : memref<32x2xf32, #tpu.memory_space<vmem>>, vector<32x2xf32>
    %c0_1 = arith.constant 0 : index
    %c0_2 = arith.constant 0 : index
    %1 = vector.load %arg3[%c0_1, %c0_2] : memref<2x16xf32, #tpu.memory_space<vmem>>, vector<2x16xf32>
    %c0_3 = arith.constant 0 : index
    %c0_4 = arith.constant 0 : index
    %2 = vector.load %arg4[%c0_3, %c0_4] : memref<1x16xf32, #tpu.memory_space<vmem>>, vector<1x16xf32>
    %3 = vector.shape_cast %2 : vector<1x16xf32> to vector<1x16xf32>
    %4 = vector.broadcast %3 : vector<1x16xf32> to vector<32x16xf32>
    %5 = vector.extract_strided_slice %0 {offsets = [0, 0], sizes = [32, 1], strides = [1, 1]} : vector<32x2xf32> to vector<32x1xf32>
    %6 = vector.extract_strided_slice %1 {offsets = [0, 0], sizes = [1, 16], strides = [1, 1]} : vector<2x16xf32> to vector<1x16xf32>
    %7 = vector.broadcast %5 : vector<32x1xf32> to vector<32x16xf32>
    %8 = vector.broadcast %6 : vector<1x16xf32> to vector<32x16xf32>
    %9 = arith.mulf %7, %8 : vector<32x16xf32>
    %10 = arith.addf %4, %9 : vector<32x16xf32>
    %11 = vector.extract_strided_slice %0 {offsets = [0, 1], sizes = [32, 1], strides = [1, 1]} : vector<32x2xf32> to vector<32x1xf32>
    %12 = vector.extract_strided_slice %1 {offsets = [1, 0], sizes = [1, 16], strides = [1, 1]} : vector<2x16xf32> to vector<1x16xf32>
    %13 = vector.broadcast %11 : vector<32x1xf32> to vector<32x16xf32>
    %14 = vector.broadcast %12 : vector<1x16xf32> to vector<32x16xf32>
    %15 = arith.mulf %13, %14 : vector<32x16xf32>
    %16 = arith.addf %10, %15 : vector<32x16xf32>
    %c0_5 = arith.constant 0 : index
    %c0_6 = arith.constant 0 : index
    %17 = vector.load %arg5[%c0_5, %c0_6] : memref<32x16xf32, #tpu.memory_space<vmem>>, vector<32x16xf32>
    tpu.vector_store %arg5[%c0_5, %c0_6], %16 {strides = array<i32>} : memref<32x16xf32, #tpu.memory_space<vmem>>, vector<32x16xf32>,
    return
  }
  func.func @transform_0(%arg0: i32, %arg1: i32) -> (i32, i32) {
    %c0_i32 = arith.constant 0 : i32
    %c0_i32_0 = arith.constant 0 : i32
    return %arg0, %c0_i32 : i32, i32
  }
  func.func @transform_1(%arg0: i32, %arg1: i32) -> (i32, i32) {
    %c0_i32 = arith.constant 0 : i32
    %c0_i32_0 = arith.constant 0 : i32
    return %c0_i32, %arg1 : i32, i32
  }
  func.func @transform_2(%arg0: i32, %arg1: i32) -> (i32, i32) {
    %c0_i32 = arith.constant 0 : i32
    %c0_i32_0 = arith.constant 0 : i32
    return %c0_i32, %arg1 : i32, i32
  }
  func.func @transform_3(%arg0: i32, %arg1: i32) -> (i32, i32) {
    %c0_i32 = arith.constant 0 : i32
    return %arg0, %arg1 : i32, i32
  }
}

</mosaic_0001>

<llo_original>
// kernel: tpu_custom_call.1
$region0: #{tpu_custom_call.1}
  #allocation0 [shape = 'u32[]', space=smem, size = 0x4, offset = 0x4, fixed_abs, tag = 'smem constant byte address 0x4 - core index']
  #allocation1 [shape = 'u32[72,128]{1,0:T(1,128)}', space=vmem, size = 0x9000, scoped, tag = 'internal scratch']
  %s0 = inlined_call_operand.vmem [shape: f32[64,2], index: 0, kind: input, shape index: {}]
  %s1 = inlined_call_operand.vmem [shape: f32[2,16], index: 1, kind: input, shape index: {}]
  %s2 = inlined_call_operand.vmem [shape: f32[1,16], index: 2, kind: input, shape index: {}]
  %s3 = inlined_call_operand.vmem [shape: f32[64,16], index: 3, kind: output, shape index: {}]
  %s4 = sld [smem:[#allocation0]]
  $region45: #{tpu_custom_call.1} parent=0
    _
  %s6 = ssub.s32 1, %s4
  %s7 = scalar_select 0, %s6, %s4
  loop: start=0, step=1, limit=4
  $region2: #{tpu_custom_call.1} parent=0 // loop_pre_header
    _
  $region3: #{tpu_custom_call.1} parent=0 // loop_header
    %s9 = sphi 0, %s13
    %p10 = scmp.ge.s32.totalorder %s9, 4
    %s16 = sphi 0, %s28
    %s17 = sphi 0, %s24
    %s18 = sphi 0, %s16
    %s19 = sphi 0, %s17
    %s20 = sphi 0, %s18
    %s21 = sphi 0, %s19
    %s31 = sphi 0, %s33
    %s34 = sphi 0, %s31
    %s35 = sphi 0, %s34
    %s51 = sphi 0, %s35
    %s57 = sphi 0, %s59
    %s60 = sphi 0, %s57
    %s61 = sphi 0, %s60
    %s77 = sphi 0, %s61
    %s83 = sphi 0, %s85
    %s86 = sphi 0, %s83
    %s87 = sphi 0, %s86
    %s103 = sphi 0, %s87
    %s111 = sphi 0, %s113
    %s114 = sphi 0, %s111
    %s115 = sphi 0, %s114
    %s131 = sphi 0, %s115
  $region4: #{tpu_custom_call.1} parent=0 // loop_header_branch
    %12 = sbr.rel (%p10) target = $region8
  $region5: #{tpu_custom_call.1} parent=0 // loop_body
    %s14 = ssub.s32 %s9, 1
    %s15 = ssub.s32 %s9, 2
    %s22 = sadd.s32 1, %s17
    %p23 = scmp.ge.s32.totalorder %s22, 1
    %s24 = scalar_select %p23, 0, %s22
    %s25 = sadd.s32 1, %s16
    %s26 = scalar_select %p23, %s25, %s16
    %p27 = scmp.ge.s32.totalorder %s26, 2
    %s28 = scalar_select %p27, 0, %s26
    %s29 = ssub.s32 %s16, %s28
    %p30 = scmp.eq.s32.totalorder %s29, 0
    %s32 = sadd.s32 %s31, 1
    %s33 = scalar_select %p30, %s31, %s32
    %p36 = pneg %p30
    %p37 = scmp.eq.s32.totalorder %s9, 1
    %p38 = por %p36, %p37
    %p39 = scmp.ne.s32.totalorder %s31, %s34
    %p40 = scmp.eq.s32.totalorder %s9, 0
    %p41 = por %p39, %p40
    %p42 = scmp.ne.s32.totalorder %s31, %s34
    %p43 = scmp.eq.s32.totalorder %s14, 1
    %p44 = por %p42, %p43
    %p45 = scmp.ne.s32.totalorder %s34, %s35
    %p46 = scmp.eq.s32.totalorder %s14, 0
    %p47 = por %p45, %p46
    %p48 = scmp.ne.s32.totalorder %s34, %s35
    %p49 = scmp.eq.s32.totalorder %s15, 1
    %p50 = por %p48, %p49
    %p52 = scmp.ne.s32.totalorder %s35, %s51
    %p53 = scmp.eq.s32.totalorder %s15, 0
    %p54 = por %p52, %p53
    %s55 = ssub.s32 %s17, %s24
    %p56 = scmp.eq.s32.totalorder %s55, 0
    %s58 = sadd.s32 %s57, 1
    %s59 = scalar_select %p56, %s57, %s58
    %p62 = pneg %p56
    %p63 = scmp.eq.s32.totalorder %s9, 1
    %p64 = por %p62, %p63
    %p65 = scmp.ne.s32.totalorder %s57, %s60
    %p66 = scmp.eq.s32.totalorder %s9, 0
    %p67 = por %p65, %p66
    %p68 = scmp.ne.s32.totalorder %s57, %s60
    %p69 = scmp.eq.s32.totalorder %s14, 1
    %p70 = por %p68, %p69
    %p71 = scmp.ne.s32.totalorder %s60, %s61
    %p72 = scmp.eq.s32.totalorder %s14, 0
    %p73 = por %p71, %p72
    %p74 = scmp.ne.s32.totalorder %s60, %s61
    %p75 = scmp.eq.s32.totalorder %s15, 1
    %p76 = por %p74, %p75
    %p78 = scmp.ne.s32.totalorder %s61, %s77
    %p79 = scmp.eq.s32.totalorder %s15, 0
    %p80 = por %p78, %p79
    %s81 = ssub.s32 %s17, %s24
    %p82 = scmp.eq.s32.totalorder %s81, 0
    %s84 = sadd.s32 %s83, 1
    %s85 = scalar_select %p82, %s83, %s84
    %p88 = pneg %p82
    %p89 = scmp.eq.s32.totalorder %s9, 1
    %p90 = por %p88, %p89
    %p91 = scmp.ne.s32.totalorder %s83, %s86
    %p92 = scmp.eq.s32.totalorder %s9, 0
    %p93 = por %p91, %p92
    %p94 = scmp.ne.s32.totalorder %s83, %s86
    %p95 = scmp.eq.s32.totalorder %s14, 1
    %p96 = por %p94, %p95
    %p97 = scmp.ne.s32.totalorder %s86, %s87
    %p98 = scmp.eq.s32.totalorder %s14, 0
    %p99 = por %p97, %p98
    %p100 = scmp.ne.s32.totalorder %s86, %s87
    %p101 = scmp.eq.s32.totalorder %s15, 1
    %p102 = por %p100, %p101
    %p104 = scmp.ne.s32.totalorder %s87, %s103
    %p105 = scmp.eq.s32.totalorder %s15, 0
    %p106 = por %p104, %p105
    %s107 = ssub.s32 %s16, %s28
    %s108 = ssub.s32 %s17, %s24
    %s109 = sor.u32 %s107, %s108
    %p110 = scmp.eq.s32.totalorder %s109, 0
    %s112 = sadd.s32 %s111, 1
    %s113 = scalar_select %p110, %s111, %s112
    %p116 = pneg %p110
    %p117 = scmp.eq.s32.totalorder %s9, 1
    %p118 = por %p116, %p117
    %p119 = scmp.ne.s32.totalorder %s111, %s114
    %p120 = scmp.eq.s32.totalorder %s9, 0
    %p121 = por %p119, %p120
    %p122 = scmp.ne.s32.totalorder %s111, %s114
    %p123 = scmp.eq.s32.totalorder %s14, 1
    %p124 = por %p122, %p123
    %p125 = scmp.ne.s32.totalorder %s114, %s115
    %p126 = scmp.eq.s32.totalorder %s14, 0
    %p127 = por %p125, %p126
    %p128 = scmp.ne.s32.totalorder %s114, %s115
    %p129 = scmp.eq.s32.totalorder %s15, 1
    %p130 = por %p128, %p129
    %p132 = scmp.ne.s32.totalorder %s115, %s131
    %p133 = scmp.eq.s32.totalorder %s15, 0
    %p134 = por %p132, %p133
    %p135 = scmp.le.s32.totalorder 1, %s9
    %p136 = scmp.lt.s32.totalorder %s9, 3
    %p137 = pnand %p135, %p136
    %p138 = pneg %p137
    // Predicated region
    $region9: #{tpu_custom_call.1} parent=5 // pred_check
      _
    $region10: #{tpu_custom_call.1} parent=5 // pred_check_branch
      %140 = sbr.rel (%p137) target = $region12
    $region11: #{tpu_custom_call.1} parent=5 // pred_region
      %s141 = ssub.s32 %s9, 1
      // Predicated region
      $region13: #{tpu_custom_call.1} parent=11 // pred_check
        %p142 = pneg %p73
      $region14: #{tpu_custom_call.1} parent=11 // pred_check_branch
        %144 = sbr.rel (%p142) target = $region16
      $region15: #{tpu_custom_call.1} parent=11 // pred_region
        %p145 = scmp.lt.s32.totalorder %s19, 0
        %s146 = scalar_select %p145, %s19, 0
        %s147 = smul.addr %s146, 2
        %s148 = scalar_lea.vmem %s1, %s147
      $region16: #{tpu_custom_call.1} parent=11 // pred_fallthru
        _
      // Predicated region
      $region17: #{tpu_custom_call.1} parent=11 // pred_check
        %p149 = pneg %p99
      $region18: #{tpu_custom_call.1} parent=11 // pred_check_branch
        %151 = sbr.rel (%p149) target = $region20
      $region19: #{tpu_custom_call.1} parent=11 // pred_region
        %p152 = scmp.lt.s32.totalorder %s19, 0
        %s153 = scalar_select %p152, %s19, 0
        %s154 = scalar_lea.vmem %s2, %s153
      $region20: #{tpu_custom_call.1} parent=11 // pred_fallthru
        _
    $region12: #{tpu_custom_call.1} parent=5 // pred_fallthru
      _
    %p155 = scmp.lt.s32.totalorder %s9, 2
    // Predicated region
    $region21: #{tpu_custom_call.1} parent=5 // pred_check
      %p156 = pneg %p155
    $region22: #{tpu_custom_call.1} parent=5 // pred_check_branch
      %158 = sbr.rel (%p156) target = $region24
    $region23: #{tpu_custom_call.1} parent=5 // pred_region
      // Predicated region
      $region25: #{tpu_custom_call.1} parent=23 // pred_check
        %p159 = pneg %p41
      $region26: #{tpu_custom_call.1} parent=23 // pred_check_branch
        %161 = sbr.rel (%p159) target = $region28
      $region27: #{tpu_custom_call.1} parent=23 // pred_region
        %s162 = smul.u32 4, %s16
        %p163 = scmp.lt.s32.totalorder %s162, 7
        %s164 = scalar_select %p163, %s162, 7
        %s165 = smul.addr %s164, 8
        %s166 = scalar_lea.vmem %s0, %s165
        %s167 = smul.u32 4, %s16
      $region28: #{tpu_custom_call.1} parent=23 // pred_fallthru
        _
    $region24: #{tpu_custom_call.1} parent=5 // pred_fallthru
      _
    %p168 = scmp.le.s32.totalorder 1, %s9
    %p169 = scmp.lt.s32.totalorder %s9, 3
    %p170 = pnand %p168, %p169
    %p171 = pneg %p170
    // Predicated region
    $region29: #{tpu_custom_call.1} parent=5 // pred_check
      _
    $region30: #{tpu_custom_call.1} parent=5 // pred_check_branch
      %173 = sbr.rel (%p170) target = $region32
    $region31: #{tpu_custom_call.1} parent=5 // pred_region
      %s174 = ssub.s32 %s9, 1
      %s175 = smul.u32 4, %s18
      %p176 = scmp.lt.s32.totalorder %s175, 7
      %s177 = scalar_select %p176, %s175, 7
      %s178 = smul.addr %s177, 8
      %s179 = scalar_lea.vmem %s0, %s178
      %p180 = pneg %p47
      %p181 = pneg %p44
      %p182 = scmp.lt.s32.totalorder %s19, 0
      %s183 = scalar_select %p182, %s19, 0
      %s184 = smul.addr %s183, 2
      %s185 = scalar_lea.vmem %s1, %s184
      %p186 = pneg %p73
      %p187 = pneg %p70
      %p188 = scmp.lt.s32.totalorder %s19, 0
      %s189 = scalar_select %p188, %s19, 0
      %s190 = scalar_lea.vmem %s2, %s189
      %p191 = pneg %p99
      %p192 = pneg %p96
      %p193 = pneg %p127
      %p194 = pneg %p124
      %s195 = smul.u32 4, %s18
      %p196 = scmp.lt.s32.totalorder %s195, 7
      %s197 = scalar_select %p196, %s195, 7
      %p198 = scmp.lt.s32.totalorder %s19, 0
      %s199 = scalar_select %p198, %s19, 0
      %s200 = sadd.s32 %s199, %s197
      %s201 = smul.addr %s200, 8
      %s202 = scalar_lea.vmem %s3, %s201
      %s203 = smul.u32 4, %s18
      %p204 = scmp.lt.s32.totalorder %s203, 7
      %s205 = scalar_select %p204, %s203, 7
      %s206 = smul.addr %s205, 8
      %s207 = scalar_lea.vmem %s0, %s206
      %s208 = smul.u32 4, %s18
      %p209 = scmp.lt.s32.totalorder %s19, 0
      %s210 = scalar_select %p209, %s19, 0
      %s211 = smul.addr %s210, 2
      %s212 = scalar_lea.vmem %s1, %s211
      %p213 = scmp.lt.s32.totalorder %s19, 0
      %s214 = scalar_select %p213, %s19, 0
      %s215 = scalar_lea.vmem %s2, %s214
      %s216 = smul.u32 4, %s18
      %p217 = scmp.lt.s32.totalorder %s216, 7
      %s218 = scalar_select %p217, %s216, 7
      %p219 = scmp.lt.s32.totalorder %s19, 0
      %s220 = scalar_select %p219, %s19, 0
      %s221 = sadd.s32 %s220, %s218
      %s222 = smul.addr %s221, 8
      %s223 = scalar_lea.vmem %s3, %s222
      %s224 = smul.u32 4, %s18
      %v225 = vld [vmem:[%s207] sm:$0xff]
      %v226 = vld [vmem:[%s207 + $0x8] sm:$0xff]
      %v227 = vld [vmem:[%s207 + $0x10] sm:$0xff]
      %v228 = vld [vmem:[%s207 + $0x18] sm:$0xff]
      %v229 = vld [vmem:[%s212] sm:$0x3]
      %v230 = vld [vmem:[%s215] sm:$0x1]
      %v232 = vperm.slane %v230, 0
      %235 = vset.pattern.permute.xlu0 0
      %236 = vperm.xlu0 %235, %v225
      %v237 = vpop.permute.xlu0 %236
      %240 = vset.pattern.permute.xlu0 0
      %241 = vperm.xlu0 %240, %v226
      %v242 = vpop.permute.xlu0 %241
      %245 = vset.pattern.permute.xlu0 0
      %246 = vperm.xlu0 %245, %v227
      %v247 = vpop.permute.xlu0 %246
      %250 = vset.pattern.permute.xlu0 0
      %251 = vperm.xlu0 %250, %v228
      %v252 = vpop.permute.xlu0 %251
      %v254 = vperm.slane %v229, 0
      %v255 = vmul.f32 %v237, %v254
      %v256 = vmul.f32 %v242, %v254
      %v257 = vmul.f32 %v247, %v254
      %v258 = vmul.f32 %v252, %v254
      %v259 = vadd.f32 %v232, %v255
      %v260 = vadd.f32 %v232, %v256
      %v261 = vadd.f32 %v232, %v257
      %v262 = vadd.f32 %v232, %v258
      %263 = vset.pattern.permute.xlu0 1
      %264 = vperm.xlu0 %263, %v225
      %v265 = vpop.permute.xlu0 %264
      %267 = vset.pattern.permute.xlu0 1
      %268 = vperm.xlu0 %267, %v226
      %v269 = vpop.permute.xlu0 %268
      %271 = vset.pattern.permute.xlu0 1
      %272 = vperm.xlu0 %271, %v227
      %v273 = vpop.permute.xlu0 %272
      %275 = vset.pattern.permute.xlu0 1
      %276 = vperm.xlu0 %275, %v228
      %v277 = vpop.permute.xlu0 %276
      %v279 = vperm.slane %v229, 1
      %v280 = vmul.f32 %v265, %v279
      %v281 = vmul.f32 %v269, %v279
      %v282 = vmul.f32 %v273, %v279
      %v283 = vmul.f32 %v277, %v279
      %v284 = vadd.f32 %v259, %v280
      %v285 = vadd.f32 %v260, %v281
      %v286 = vadd.f32 %v261, %v282
      %v287 = vadd.f32 %v262, %v283
      %vm288 = vcmask 130048
      %289 = vst.msk [vmem:[%s223] sm:$0xff] %vm288, %v284
      %290 = vst.msk [vmem:[%s223 + $0x8] sm:$0xff] %vm288, %v285
      %291 = vst.msk [vmem:[%s223 + $0x10] sm:$0xff] %vm288, %v286
      %292 = vst.msk [vmem:[%s223 + $0x18] sm:$0xff] %vm288, %v287
      %s293 = smul.u32 4, %s18
      %p294 = scmp.lt.s32.totalorder %s293, 7
      %s295 = scalar_select %p294, %s293, 7
      %p296 = scmp.lt.s32.totalorder %s19, 0
      %s297 = scalar_select %p296, %s19, 0
      %s298 = sadd.s32 %s297, %s295
      %s299 = smul.addr %s298, 8
      %s300 = scalar_lea.vmem %s3, %s299
      // Predicated region
      $region33: #{tpu_custom_call.1} parent=31 // pred_check
        %p301 = pneg %p124
      $region34: #{tpu_custom_call.1} parent=31 // pred_check_branch
        %303 = sbr.rel (%p301) target = $region36
      $region35: #{tpu_custom_call.1} parent=31 // pred_region
        %s304 = smul.u32 4, %s18
      $region36: #{tpu_custom_call.1} parent=31 // pred_fallthru
        _
    $region32: #{tpu_custom_call.1} parent=5 // pred_fallthru
      _
    %p305 = scmp.le.s32.totalorder 2, %s9
    // Predicated region
    $region37: #{tpu_custom_call.1} parent=5 // pred_check
      %p306 = pneg %p305
    $region38: #{tpu_custom_call.1} parent=5 // pred_check_branch
      %308 = sbr.rel (%p306) target = $region40
    $region39: #{tpu_custom_call.1} parent=5 // pred_region
      %s309 = ssub.s32 %s9, 2
      // Predicated region
      $region41: #{tpu_custom_call.1} parent=39 // pred_check
        %p310 = pneg %p130
      $region42: #{tpu_custom_call.1} parent=39 // pred_check_branch
        %312 = sbr.rel (%p310) target = $region44
      $region43: #{tpu_custom_call.1} parent=39 // pred_region
        %s313 = smul.u32 4, %s20
        %p314 = scmp.lt.s32.totalorder %s313, 7
        %s315 = scalar_select %p314, %s313, 7
        %p316 = scmp.lt.s32.totalorder %s21, 0
        %s317 = scalar_select %p316, %s21, 0
        %s318 = sadd.s32 %s317, %s315
        %s319 = smul.addr %s318, 8
        %s320 = scalar_lea.vmem %s3, %s319
      $region44: #{tpu_custom_call.1} parent=39 // pred_fallthru
        _
    $region40: #{tpu_custom_call.1} parent=5 // pred_fallthru
      _
  $region6: #{tpu_custom_call.1} parent=0 // loop_footer
    %s13 = sadd.s32 1, %s9
  $region7: #{tpu_custom_call.1} parent=0 // loop_footer_branch
    %8 = sbr.rel target = $region3
  $region8: #{tpu_custom_call.1} parent=0 // loop_exit
    _

// kernel: tpu_custom_call.1
$region0: #{tpu_custom_call.1}
  #allocation0 [shape = 'u32[]', space=smem, size = 0x4, offset = 0x4, fixed_abs, tag = 'smem constant byte address 0x4 - core index']
  #allocation1 [shape = 'u32[72,128]{1,0:T(1,128)}', space=vmem, size = 0x9000, scoped, tag = 'internal scratch']
  %s0 = inlined_call_operand.vmem [shape: f32[64,2], index: 0, kind: input, shape index: {}]
  %s1 = inlined_call_operand.vmem [shape: f32[2,16], index: 1, kind: input, shape index: {}]
  %s2 = inlined_call_operand.vmem [shape: f32[1,16], index: 2, kind: input, shape index: {}]
  %s3 = inlined_call_operand.vmem [shape: f32[64,16], index: 3, kind: output, shape index: {}]
  %s4 = sld [smem:[#allocation0]]
  $region45: #{tpu_custom_call.1} parent=0
    _
  %s6 = ssub.s32 1, %s4
  %s7 = scalar_select 0, %s6, %s4
  loop: start=0, step=1, limit=4
  $region2: #{tpu_custom_call.1} parent=0 // loop_pre_header
    _
  $region3: #{tpu_custom_call.1} parent=0 // loop_header
    %s9 = sphi 0, %s13
    %p10 = scmp.ge.s32.totalorder %s9, 4
    %s16 = sphi 0, %s28
    %s17 = sphi 0, %s24
    %s18 = sphi 0, %s16
    %s19 = sphi 0, %s17
    %s20 = sphi 0, %s18
    %s21 = sphi 0, %s19
    %s31 = sphi 0, %s33
    %s34 = sphi 0, %s31
    %s35 = sphi 0, %s34
    %s51 = sphi 0, %s35
    %s57 = sphi 0, %s59
    %s60 = sphi 0, %s57
    %s61 = sphi 0, %s60
    %s77 = sphi 0, %s61
    %s83 = sphi 0, %s85
    %s86 = sphi 0, %s83
    %s87 = sphi 0, %s86
    %s103 = sphi 0, %s87
    %s111 = sphi 0, %s113
    %s114 = sphi 0, %s111
    %s115 = sphi 0, %s114
    %s131 = sphi 0, %s115
  $region4: #{tpu_custom_call.1} parent=0 // loop_header_branch
    %12 = sbr.rel (%p10) target = $region8
  $region5: #{tpu_custom_call.1} parent=0 // loop_body
    %s14 = ssub.s32 %s9, 1
    %s15 = ssub.s32 %s9, 2
    %s22 = sadd.s32 1, %s17
    %p23 = scmp.ge.s32.totalorder %s22, 1
    %s24 = scalar_select %p23, 0, %s22
    %s25 = sadd.s32 1, %s16
    %s26 = scalar_select %p23, %s25, %s16
    %p27 = scmp.ge.s32.totalorder %s26, 2
    %s28 = scalar_select %p27, 0, %s26
    %s29 = ssub.s32 %s16, %s28
    %p30 = scmp.eq.s32.totalorder %s29, 0
    %s32 = sadd.s32 %s31, 1
    %s33 = scalar_select %p30, %s31, %s32
    %p36 = pneg %p30
    %p37 = scmp.eq.s32.totalorder %s9, 1
    %p38 = por %p36, %p37
    %p39 = scmp.ne.s32.totalorder %s31, %s34
    %p40 = scmp.eq.s32.totalorder %s9, 0
    %p41 = por %p39, %p40
    %p42 = scmp.ne.s32.totalorder %s31, %s34
    %p43 = scmp.eq.s32.totalorder %s14, 1
    %p44 = por %p42, %p43
    %p45 = scmp.ne.s32.totalorder %s34, %s35
    %p46 = scmp.eq.s32.totalorder %s14, 0
    %p47 = por %p45, %p46
    %p48 = scmp.ne.s32.totalorder %s34, %s35
    %p49 = scmp.eq.s32.totalorder %s15, 1
    %p50 = por %p48, %p49
    %p52 = scmp.ne.s32.totalorder %s35, %s51
    %p53 = scmp.eq.s32.totalorder %s15, 0
    %p54 = por %p52, %p53
    %s55 = ssub.s32 %s17, %s24
    %p56 = scmp.eq.s32.totalorder %s55, 0
    %s58 = sadd.s32 %s57, 1
    %s59 = scalar_select %p56, %s57, %s58
    %p62 = pneg %p56
    %p63 = scmp.eq.s32.totalorder %s9, 1
    %p64 = por %p62, %p63
    %p65 = scmp.ne.s32.totalorder %s57, %s60
    %p66 = scmp.eq.s32.totalorder %s9, 0
    %p67 = por %p65, %p66
    %p68 = scmp.ne.s32.totalorder %s57, %s60
    %p69 = scmp.eq.s32.totalorder %s14, 1
    %p70 = por %p68, %p69
    %p71 = scmp.ne.s32.totalorder %s60, %s61
    %p72 = scmp.eq.s32.totalorder %s14, 0
    %p73 = por %p71, %p72
    %p74 = scmp.ne.s32.totalorder %s60, %s61
    %p75 = scmp.eq.s32.totalorder %s15, 1
    %p76 = por %p74, %p75
    %p78 = scmp.ne.s32.totalorder %s61, %s77
    %p79 = scmp.eq.s32.totalorder %s15, 0
    %p80 = por %p78, %p79
    %s81 = ssub.s32 %s17, %s24
    %p82 = scmp.eq.s32.totalorder %s81, 0
    %s84 = sadd.s32 %s83, 1
    %s85 = scalar_select %p82, %s83, %s84
    %p88 = pneg %p82
    %p89 = scmp.eq.s32.totalorder %s9, 1
    %p90 = por %p88, %p89
    %p91 = scmp.ne.s32.totalorder %s83, %s86
    %p92 = scmp.eq.s32.totalorder %s9, 0
    %p93 = por %p91, %p92
    %p94 = scmp.ne.s32.totalorder %s83, %s86
    %p95 = scmp.eq.s32.totalorder %s14, 1
    %p96 = por %p94, %p95
    %p97 = scmp.ne.s32.totalorder %s86, %s87
    %p98 = scmp.eq.s32.totalorder %s14, 0
    %p99 = por %p97, %p98
    %p100 = scmp.ne.s32.totalorder %s86, %s87
    %p101 = scmp.eq.s32.totalorder %s15, 1
    %p102 = por %p100, %p101
    %p104 = scmp.ne.s32.totalorder %s87, %s103
    %p105 = scmp.eq.s32.totalorder %s15, 0
    %p106 = por %p104, %p105
    %s107 = ssub.s32 %s16, %s28
    %s108 = ssub.s32 %s17, %s24
    %s109 = sor.u32 %s107, %s108
    %p110 = scmp.eq.s32.totalorder %s109, 0
    %s112 = sadd.s32 %s111, 1
    %s113 = scalar_select %p110, %s111, %s112
    %p116 = pneg %p110
    %p117 = scmp.eq.s32.totalorder %s9, 1
    %p118 = por %p116, %p117
    %p119 = scmp.ne.s32.totalorder %s111, %s114
    %p120 = scmp.eq.s32.totalorder %s9, 0
    %p121 = por %p119, %p120
    %p122 = scmp.ne.s32.totalorder %s111, %s114
    %p123 = scmp.eq.s32.totalorder %s14, 1
    %p124 = por %p122, %p123
    %p125 = scmp.ne.s32.totalorder %s114, %s115
    %p126 = scmp.eq.s32.totalorder %s14, 0
    %p127 = por %p125, %p126
    %p128 = scmp.ne.s32.totalorder %s114, %s115
    %p129 = scmp.eq.s32.totalorder %s15, 1
    %p130 = por %p128, %p129
    %p132 = scmp.ne.s32.totalorder %s115, %s131
    %p133 = scmp.eq.s32.totalorder %s15, 0
    %p134 = por %p132, %p133
    %p135 = scmp.le.s32.totalorder 1, %s9
    %p136 = scmp.lt.s32.totalorder %s9, 3
    %p137 = pnand %p135, %p136
    %p138 = pneg %p137
    // Predicated region
    $region9: #{tpu_custom_call.1} parent=5 // pred_check
      _
    $region10: #{tpu_custom_call.1} parent=5 // pred_check_branch
      %140 = sbr.rel (%p137) target = $region12
    $region11: #{tpu_custom_call.1} parent=5 // pred_region
      %s141 = ssub.s32 %s9, 1
      // Predicated region
      $region13: #{tpu_custom_call.1} parent=11 // pred_check
        %p142 = pneg %p73
      $region14: #{tpu_custom_call.1} parent=11 // pred_check_branch
        %144 = sbr.rel (%p142) target = $region16
      $region15: #{tpu_custom_call.1} parent=11 // pred_region
        %p145 = scmp.lt.s32.totalorder %s19, 0
        %s146 = scalar_select %p145, %s19, 0
        %s147 = smul.addr %s146, 2
        %s148 = scalar_lea.vmem %s1, %s147
      $region16: #{tpu_custom_call.1} parent=11 // pred_fallthru
        _
      // Predicated region
      $region17: #{tpu_custom_call.1} parent=11 // pred_check
        %p149 = pneg %p99
      $region18: #{tpu_custom_call.1} parent=11 // pred_check_branch
        %151 = sbr.rel (%p149) target = $region20
      $region19: #{tpu_custom_call.1} parent=11 // pred_region
        %p152 = scmp.lt.s32.totalorder %s19, 0
        %s153 = scalar_select %p152, %s19, 0
        %s154 = scalar_lea.vmem %s2, %s153
      $region20: #{tpu_custom_call.1} parent=11 // pred_fallthru
        _
    $region12: #{tpu_custom_call.1} parent=5 // pred_fallthru
      _
    %p155 = scmp.lt.s32.totalorder %s9, 2
    // Predicated region
    $region21: #{tpu_custom_call.1} parent=5 // pred_check
      %p156 = pneg %p155
    $region22: #{tpu_custom_call.1} parent=5 // pred_check_branch
      %158 = sbr.rel (%p156) target = $region24
    $region23: #{tpu_custom_call.1} parent=5 // pred_region
      // Predicated region
      $region25: #{tpu_custom_call.1} parent=23 // pred_check
        %p159 = pneg %p41
      $region26: #{tpu_custom_call.1} parent=23 // pred_check_branch
        %161 = sbr.rel (%p159) target = $region28
      $region27: #{tpu_custom_call.1} parent=23 // pred_region
        %s162 = smul.u32 4, %s16
        %p163 = scmp.lt.s32.totalorder %s162, 7
        %s164 = scalar_select %p163, %s162, 7
        %s165 = smul.addr %s164, 8
        %s166 = scalar_lea.vmem %s0, %s165
        %s167 = smul.u32 4, %s16
      $region28: #{tpu_custom_call.1} parent=23 // pred_fallthru
        _
    $region24: #{tpu_custom_call.1} parent=5 // pred_fallthru
      _
    %p168 = scmp.le.s32.totalorder 1, %s9
    %p169 = scmp.lt.s32.totalorder %s9, 3
    %p170 = pnand %p168, %p169
    %p171 = pneg %p170
    // Predicated region
    $region29: #{tpu_custom_call.1} parent=5 // pred_check
      _
    $region30: #{tpu_custom_call.1} parent=5 // pred_check_branch
      %173 = sbr.rel (%p170) target = $region32
    $region31: #{tpu_custom_call.1} parent=5 // pred_region
      %s174 = ssub.s32 %s9, 1
      %s175 = smul.u32 4, %s18
      %p176 = scmp.lt.s32.totalorder %s175, 7
      %s177 = scalar_select %p176, %s175, 7
      %s178 = smul.addr %s177, 8
      %s179 = scalar_lea.vmem %s0, %s178
      %p180 = pneg %p47
      %p181 = pneg %p44
      %p182 = scmp.lt.s32.totalorder %s19, 0
      %s183 = scalar_select %p182, %s19, 0
      %s184 = smul.addr %s183, 2
      %s185 = scalar_lea.vmem %s1, %s184
      %p186 = pneg %p73
      %p187 = pneg %p70
      %p188 = scmp.lt.s32.totalorder %s19, 0
      %s189 = scalar_select %p188, %s19, 0
      %s190 = scalar_lea.vmem %s2, %s189
      %p191 = pneg %p99
      %p192 = pneg %p96
      %p193 = pneg %p127
      %p194 = pneg %p124
      %s195 = smul.u32 4, %s18
      %p196 = scmp.lt.s32.totalorder %s195, 7
      %s197 = scalar_select %p196, %s195, 7
      %p198 = scmp.lt.s32.totalorder %s19, 0
      %s199 = scalar_select %p198, %s19, 0
      %s200 = sadd.s32 %s199, %s197
      %s201 = smul.addr %s200, 8
      %s202 = scalar_lea.vmem %s3, %s201
      %s203 = smul.u32 4, %s18
      %p204 = scmp.lt.s32.totalorder %s203, 7
      %s205 = scalar_select %p204, %s203, 7
      %s206 = smul.addr %s205, 8
      %s207 = scalar_lea.vmem %s0, %s206
      %s208 = smul.u32 4, %s18
      %p209 = scmp.lt.s32.totalorder %s19, 0
      %s210 = scalar_select %p209, %s19, 0
      %s211 = smul.addr %s210, 2
      %s212 = scalar_lea.vmem %s1, %s211
      %p213 = scmp.lt.s32.totalorder %s19, 0
      %s214 = scalar_select %p213, %s19, 0
      %s215 = scalar_lea.vmem %s2, %s214
      %s216 = smul.u32 4, %s18
      %p217 = scmp.lt.s32.totalorder %s216, 7
      %s218 = scalar_select %p217, %s216, 7
      %p219 = scmp.lt.s32.totalorder %s19, 0
      %s220 = scalar_select %p219, %s19, 0
      %s221 = sadd.s32 %s220, %s218
      %s222 = smul.addr %s221, 8
      %s223 = scalar_lea.vmem %s3, %s222
      %s224 = smul.u32 4, %s18
      %v225 = vld [vmem:[%s207] sm:$0xff]
      %v226 = vld [vmem:[%s207 + $0x8] sm:$0xff]
      %v227 = vld [vmem:[%s207 + $0x10] sm:$0xff]
      %v228 = vld [vmem:[%s207 + $0x18] sm:$0xff]
      %v229 = vld [vmem:[%s212] sm:$0x3]
      %v230 = vld [vmem:[%s215] sm:$0x1]
      %v232 = vperm.slane %v230, 0
      %235 = vset.pattern.permute.xlu0 0
      %236 = vperm.xlu0 %235, %v225
      %v237 = vpop.permute.xlu0 %236
      %240 = vset.pattern.permute.xlu0 0
      %241 = vperm.xlu0 %240, %v226
      %v242 = vpop.permute.xlu0 %241
      %245 = vset.pattern.permute.xlu0 0
      %246 = vperm.xlu0 %245, %v227
      %v247 = vpop.permute.xlu0 %246
      %250 = vset.pattern.permute.xlu0 0
      %251 = vperm.xlu0 %250, %v228
      %v252 = vpop.permute.xlu0 %251
      %v254 = vperm.slane %v229, 0
      %v255 = vmul.f32 %v237, %v254
      %v256 = vmul.f32 %v242, %v254
      %v257 = vmul.f32 %v247, %v254
      %v258 = vmul.f32 %v252, %v254
      %v259 = vadd.f32 %v232, %v255
      %v260 = vadd.f32 %v232, %v256
      %v261 = vadd.f32 %v232, %v257
      %v262 = vadd.f32 %v232, %v258
      %263 = vset.pattern.permute.xlu0 1
      %264 = vperm.xlu0 %263, %v225
      %v265 = vpop.permute.xlu0 %264
      %267 = vset.pattern.permute.xlu0 1
      %268 = vperm.xlu0 %267, %v226
      %v269 = vpop.permute.xlu0 %268
      %271 = vset.pattern.permute.xlu0 1
      %272 = vperm.xlu0 %271, %v227
      %v273 = vpop.permute.xlu0 %272
      %275 = vset.pattern.permute.xlu0 1
      %276 = vperm.xlu0 %275, %v228
      %v277 = vpop.permute.xlu0 %276
      %v279 = vperm.slane %v229, 1
      %v280 = vmul.f32 %v265, %v279
      %v281 = vmul.f32 %v269, %v279
      %v282 = vmul.f32 %v273, %v279
      %v283 = vmul.f32 %v277, %v279
      %v284 = vadd.f32 %v259, %v280
      %v285 = vadd.f32 %v260, %v281
      %v286 = vadd.f32 %v261, %v282
      %v287 = vadd.f32 %v262, %v283
      %vm288 = vcmask 130048
      %289 = vst.msk [vmem:[%s223] sm:$0xff] %vm288, %v284
      %290 = vst.msk [vmem:[%s223 + $0x8] sm:$0xff] %vm288, %v285
      %291 = vst.msk [vmem:[%s223 + $0x10] sm:$0xff] %vm288, %v286
      %292 = vst.msk [vmem:[%s223 + $0x18] sm:$0xff] %vm288, %v287
      %s293 = smul.u32 4, %s18
      %p294 = scmp.lt.s32.totalorder %s293, 7
      %s295 = scalar_select %p294, %s293, 7
      %p296 = scmp.lt.s32.totalorder %s19, 0
      %s297 = scalar_select %p296, %s19, 0
      %s298 = sadd.s32 %s297, %s295
      %s299 = smul.addr %s298, 8
      %s300 = scalar_lea.vmem %s3, %s299
      // Predicated region
      $region33: #{tpu_custom_call.1} parent=31 // pred_check
        %p301 = pneg %p124
      $region34: #{tpu_custom_call.1} parent=31 // pred_check_branch
        %303 = sbr.rel (%p301) target = $region36
      $region35: #{tpu_custom_call.1} parent=31 // pred_region
        %s304 = smul.u32 4, %s18
      $region36: #{tpu_custom_call.1} parent=31 // pred_fallthru
        _
    $region32: #{tpu_custom_call.1} parent=5 // pred_fallthru
      _
    %p305 = scmp.le.s32.totalorder 2, %s9
    // Predicated region
    $region37: #{tpu_custom_call.1} parent=5 // pred_check
      %p306 = pneg %p305
    $region38: #{tpu_custom_call.1} parent=5 // pred_check_branch
      %308 = sbr.rel (%p306) target = $region40
    $region39: #{tpu_custom_call.1} parent=5 // pred_region
      %s309 = ssub.s32 %s9, 2
      // Predicated region
      $region41: #{tpu_custom_call.1} parent=39 // pred_check
        %p310 = pneg %p130
      $region42: #{tpu_custom_call.1} parent=39 // pred_check_branch
        %312 = sbr.rel (%p310) target = $region44
      $region43: #{tpu_custom_call.1} parent=39 // pred_region
        %s313 = smul.u32 4, %s20
        %p314 = scmp.lt.s32.totalorder %s313, 7
        %s315 = scalar_select %p314, %s313, 7
        %p316 = scmp.lt.s32.totalorder %s21, 0
        %s317 = scalar_select %p316, %s21, 0
        %s318 = sadd.s32 %s317, %s315
        %s319 = smul.addr %s318, 8
        %s320 = scalar_lea.vmem %s3, %s319
      $region44: #{tpu_custom_call.1} parent=39 // pred_fallthru
        _
    $region40: #{tpu_custom_call.1} parent=5 // pred_fallthru
      _
  $region6: #{tpu_custom_call.1} parent=0 // loop_footer
    %s13 = sadd.s32 1, %s9
  $region7: #{tpu_custom_call.1} parent=0 // loop_footer_branch
    %8 = sbr.rel target = $region3
  $region8: #{tpu_custom_call.1} parent=0 // loop_exit
    _

</llo_original>
